<compile_context>
chip_gen: v6e
topology: v6e:2x2x1
jax: 0.10.0
libtpu: 0.0.40
codegen_flags: <defaults>
</compile_context>

<pallas_src>
import functools

import jax
import jax.numpy as jnp
from jax.experimental import pallas as pl
from jax.experimental.pallas import tpu as pltpu


# ----------------------------------------------------------------------------
# per-generation budgets (v7x: 64 MiB VMEM / TC, v5e & v6e: 128 MiB)
# ----------------------------------------------------------------------------
def _tpu_vmem_capacity():
    try:
        info = pltpu.get_tpu_info()
        for attr in ("vmem_capacity_bytes", "vmem_size_bytes", "vmem_bytes"):
            v = getattr(info, attr, None)
            if v:
                return int(v)
    except Exception:
        pass
    return 64 * 1024 * 1024          # conservative default (v7x-sized)


_VMEM_PHYS = _tpu_vmem_capacity()
if _VMEM_PHYS >= 96 * 1024 * 1024:       # v5e / v6e
    _VMEM_LIMIT = 96 * 1024 * 1024
    _TILE_CAP = 1024                     # tiles are 256-aligned at these sizes
    _LN_TM_CAP = 512
else:                                    # v7x
    _VMEM_LIMIT = 48 * 1024 * 1024
    _TILE_CAP = 512
    _LN_TM_CAP = 256                     # full-K LN blocks must stay small on 64 MiB


# ----------------------------------------------------------------------------
# helpers
# ----------------------------------------------------------------------------
def _round_up(x, m):
    return ((x + m - 1) // m) * m


def _pad2(x, rows, cols):
    r, c = x.shape
    if r == rows and c == cols:
        return x
    return jnp.pad(x, ((0, rows - r), (0, cols - c)))


# ----------------------------------------------------------------------------
# Pallas kernels
# ----------------------------------------------------------------------------
def _linear_kernel(x_ref, w_ref, b_ref, *rest, activation, has_residual, direct_acc):
    """Tiled matmul with K-reduction grid; bf16 MXU operands, f32 accumulation.
    f32 outputs accumulate directly into the resident o_ref block (no scratch)."""
    if has_residual:
        r_ref = rest[0]
        rest = rest[1:]
    else:
        r_ref = None
    if direct_acc:
        (o_ref,) = rest
        acc_ref = o_ref
    else:
        o_ref, acc_ref = rest
    k = pl.program_id(2)

    @pl.when(k == 0)
    def _():
        acc_ref[...] = jnp.zeros_like(acc_ref)

    acc_ref[...] += jnp.dot(x_ref[...], w_ref[...],          # both bf16 already
                            preferred_element_type=jnp.float32)

    @pl.when(k == pl.num_programs(2) - 1)
    def _():
        y = acc_ref[...] + b_ref[...]
        if activation == "gelu":
            y = jax.nn.gelu(y, approximate=True)              # tanh approx -> EUP slot
        if r_ref is not None:
            y = y + r_ref[...]
        o_ref[...] = y.astype(o_ref.dtype)


def pallas_linear(x, w, b, residual=None, activation=None, out_dtype=jnp.float32):
    """y = act(x @ w + b) (+ residual).  x:(M,K), w:(K,N) bf16, b:(N,) f32."""
    M, K = x.shape
    N = w.shape[1]
    tm = min(_TILE_CAP, _round_up(M, 8))
    tn = min(_TILE_CAP, _round_up(N, 128))
    tkb = min(_TILE_CAP, _round_up(K, 128))
    Mp, Np, Kp = _round_up(M, tm), _round_up(N, tn), _round_up(K, tkb)

    # bf16 activation stream: halves x DMA bytes + removes per-K in-kernel cast.
    xp = _pad2(x, Mp, Kp).astype(jnp.bfloat16)
    wp = _pad2(w, Kp, Np).astype(jnp.bfloat16)
    bp = _pad2(b.reshape(1, N).astype(jnp.float32), 1, Np)

    direct_acc = (out_dtype == jnp.float32)
    in_specs = [pl.BlockSpec((tm, tkb), lambda i, j, k: (i, k)),
                pl.BlockSpec((tkb, tn), lambda i, j, k: (k, j)),
                pl.BlockSpec((1, tn), lambda i, j, k: (0, j))]
    args = [xp, wp, bp]
    if residual is not None:
        in_specs.append(pl.BlockSpec((tm, tn), lambda i, j, k: (i, j)))
        args.append(_pad2(residual, Mp, Np).astype(jnp.float32))
    scratch = [] if direct_acc else [pltpu.VMEM((tm, tn), jnp.float32)]

    out = pl.pallas_call(
        functools.partial(_linear_kernel, activation=activation,
                          has_residual=residual is not None, direct_acc=direct_acc),
        out_shape=jax.ShapeDtypeStruct((Mp, Np), out_dtype),
        grid=(Mp // tm, Np // tn, Kp // tkb),
        in_specs=in_specs,
        out_specs=pl.BlockSpec((tm, tn), lambda i, j, k: (i, j)),
        scratch_shapes=scratch,
        compiler_params=pltpu.CompilerParams(
            dimension_semantics=("parallel", "parallel", "arbitrary"),
            vmem_limit_bytes=_VMEM_LIMIT),
    )(*args)
    if Mp != M or Np != N:
        out = out[:M, :N]
    return out


def _ln_linear_kernel(x_ref, g_ref, bln_ref, w_ref, b_ref, o_ref, h_ref,
                      *, activation, eps):
    """Fused LayerNorm (f32 stats) + matmul (+bias, +optional GELU).
    The normalized block is computed once per row tile (j==0) and reused."""
    j = pl.program_id(1)

    @pl.when(j == 0)
    def _():
        x = x_ref[...]
        mu = jnp.mean(x, axis=-1, keepdims=True)
        var = jnp.mean((x - mu) ** 2, axis=-1, keepdims=True)
        h = (x - mu) * jax.lax.rsqrt(var + eps)
        h = h * g_ref[...] + bln_ref[...]
        h_ref[...] = h.astype(h_ref.dtype)                    # bf16 MXU operand

    y = jnp.dot(h_ref[...], w_ref[...],
                preferred_element_type=jnp.float32) + b_ref[...]
    if activation == "gelu":
        y = jax.nn.gelu(y, approximate=True)
    o_ref[...] = y.astype(o_ref.dtype)


def pallas_ln_linear(x, ln_g, ln_b, w, b, activation=None, out_dtype=jnp.float32):
    """LayerNorm(x) @ w + b (optionally GELU).  Full-K block (LN needs whole row)."""
    # TODO(synk): for very large K on v7x a two-pass (K-tiled) LN would allow bigger tm.
    M, K = x.shape
    N = w.shape[1]
    tm = min(_LN_TM_CAP, _round_up(M, 8))
    tn = min(_TILE_CAP, _round_up(N, 128))
    Mp, Np = _round_up(M, tm), _round_up(N, tn)
    xp = _pad2(x.astype(jnp.float32), Mp, K)                  # f32 for LN stats
    wp = _pad2(w, K, Np).astype(jnp.bfloat16)
    bp = _pad2(b.reshape(1, N).astype(jnp.float32), 1, Np)
    out = pl.pallas_call(
        functools.partial(_ln_linear_kernel, activation=activation, eps=1e-5),
        out_shape=jax.ShapeDtypeStruct((Mp, Np), out_dtype),
        grid=(Mp // tm, Np // tn),
        in_specs=[pl.BlockSpec((tm, K), lambda i, j: (i, 0)),
                  pl.BlockSpec((1, K), lambda i, j: (0, 0)),
                  pl.BlockSpec((1, K), lambda i, j: (0, 0)),
                  pl.BlockSpec((K, tn), lambda i, j: (0, j)),
                  pl.BlockSpec((1, tn), lambda i, j: (0, j))],
        out_specs=pl.BlockSpec((tm, tn), lambda i, j: (i, j)),
        scratch_shapes=[pltpu.VMEM((tm, K), jnp.bfloat16)],
        # j must be "arbitrary": LN scratch computed at j==0 is reused for j>0.
        compiler_params=pltpu.CompilerParams(
            dimension_semantics=("parallel", "arbitrary"),
            vmem_limit_bytes=_VMEM_LIMIT),
    )(xp, ln_g.reshape(1, K).astype(jnp.float32),
      ln_b.reshape(1, K).astype(jnp.float32), wp, bp)
    if Mp != M or Np != N:
        out = out[:M, :N]
    return out


def _attn_kernel(q_ref, k_ref, v_ref, o_ref, *, scale):
    q = q_ref[...] * scale                                    # fold 1/sqrt(d) (VPU mul)
    s = jnp.einsum('hqd,hkd->hqk', q, k_ref[...],
                   preferred_element_type=jnp.float32)
    s = s - jnp.max(s, axis=-1, keepdims=True)                # softmax kept in f32
    p = jnp.exp(s)
    p = p * pl.reciprocal(jnp.sum(p, axis=-1, keepdims=True), approx=True)  # EUP
    o_ref[...] = jnp.einsum('hqk,hkd->hqd', p.astype(jnp.bfloat16), v_ref[...],
                            preferred_element_type=jnp.float32).astype(o_ref.dtype)


def pallas_attention(q, k, v):
    """q,k,v: (B*heads, n, head_dim) bf16 -> (B*heads, n, head_dim) bf16.
    Several heads per grid step; grid extent kept >= 2 where possible (v7x 2 TCs)."""
    # TODO(synk): switch to a flash-style kv-tiled kernel once n grows past a few hundred.
    BH, n, d = q.shape
    divs = [dd for dd in range(1, BH + 1) if BH % dd == 0 and dd <= 16]
    good = [dd for dd in divs if BH // dd >= 2]
    Hb = max(good) if good else max(divs)
    return pl.pallas_call(
        functools.partial(_attn_kernel, scale=1.0 / (d ** 0.5)),
        out_shape=jax.ShapeDtypeStruct((BH, n, d), jnp.bfloat16),
        grid=(BH // Hb,),
        in_specs=[pl.BlockSpec((Hb, n, d), lambda i: (i, 0, 0))] * 3,
        out_specs=pl.BlockSpec((Hb, n, d), lambda i: (i, 0, 0)),
        compiler_params=pltpu.CompilerParams(
            dimension_semantics=("parallel",),
            vmem_limit_bytes=_VMEM_LIMIT),
    )(q, k, v)


def _chamfer_kernel(a_ref, b_ref, o_ref):
    """Pure-VPU chamfer: clouds live on the lane axis.  a,b blocks: (P, 3, bt)."""
    a = a_ref[...]
    b = b_ref[...]
    dist = None
    for d_ in range(a.shape[1]):                               # unrolled over x,y,z
        t = a[:, d_, :][:, None, :] - b[:, d_, :][None, :, :]  # (P, P, bt)
        dist = t * t if dist is None else dist + t * t
    d1 = jnp.mean(jnp.min(dist, axis=0), axis=0)               # per b-point closest a
    d2 = jnp.mean(jnp.min(dist, axis=1), axis=0)               # per a-point closest b
    o_ref[...] = (d1 + d2)[None, :]                            # lane-dense (1, bt) row


def pallas_chamfer(a, b):
    """Symmetric squared chamfer distance, a,b: (Bn, P, 3) -> (Bn,), one launch."""
    Bn, P, _ = a.shape
    bt = 128
    Bp = _round_up(Bn, bt)
    ap = jnp.pad(a, ((0, Bp - Bn), (0, 0), (0, 0))).transpose(1, 2, 0)   # (P, 3, Bp)
    bp = jnp.pad(b, ((0, Bp - Bn), (0, 0), (0, 0))).transpose(1, 2, 0)
    out = pl.pallas_call(
        _chamfer_kernel,
        out_shape=jax.ShapeDtypeStruct((1, Bp), jnp.float32),
        grid=(Bp // bt,),
        in_specs=[pl.BlockSpec((P, 3, bt), lambda i: (0, 0, i))] * 2,
        out_specs=pl.BlockSpec((1, bt), lambda i: (0, i)),
        compiler_params=pltpu.CompilerParams(
            dimension_semantics=("parallel",),
            vmem_limit_bytes=_VMEM_LIMIT),
    )(ap, bp)
    return out[0, :Bn]


def _smooth_l1_kernel(p_ref, t_ref, o_ref, *, inv_count):
    step = pl.program_id(0)

    @pl.when(step == 0)
    def _():
        o_ref[0, 0] = jnp.float32(0.0)

    d = p_ref[...] - t_ref[...]
    ad = jnp.abs(d)
    loss = jnp.where(ad < 1.0, 0.5 * d * d, ad - 0.5)
    o_ref[0, 0] += jnp.sum(loss)

    @pl.when(step == pl.num_programs(0) - 1)
    def _():
        o_ref[0, 0] = o_ref[0, 0] * inv_count


def pallas_smooth_l1(pred, target):
    """Mean SmoothL1 (beta=1) over all elements; tiled, lane-dense blocks,
    SMEM scalar accumulator (zero padding contributes 0 to the sum)."""
    n = int(pred.size)
    cols, rows_blk = 512, 8
    chunk = rows_blk * cols
    total = _round_up(n, chunk)
    pf = jnp.pad(pred.reshape(-1).astype(jnp.float32), (0, total - n)).reshape(-1, cols)
    tf = jnp.pad(target.reshape(-1).astype(jnp.float32), (0, total - n)).reshape(-1, cols)
    out = pl.pallas_call(
        functools.partial(_smooth_l1_kernel, inv_count=1.0 / float(n)),
        out_shape=jax.ShapeDtypeStruct((1, 1), jnp.float32),
        grid=(total // chunk,),
        in_specs=[pl.BlockSpec((rows_blk, cols), lambda i: (i, 0))] * 2,
        out_specs=pl.BlockSpec(memory_space=pltpu.MemorySpace.SMEM),
        compiler_params=pltpu.CompilerParams(
            dimension_semantics=("arbitrary",),
            vmem_limit_bytes=_VMEM_LIMIT),
    )(pf, tf)
    return out[0, 0]


# ----------------------------------------------------------------------------
# Model pieces (glue in plain JAX, all dense math via the Pallas kernels above)
# ----------------------------------------------------------------------------
def init_linear(key, cin, cout):
    w = jax.random.normal(key, (cin, cout), jnp.float32) * 0.02
    return dict(w=w.astype(jnp.bfloat16),             # bf16 weight stream for the MXU
                b=jnp.zeros((cout,), jnp.float32))


def init_transformer(key, dim, depth, heads, head_dim, mlp_dim):
    blocks = []
    for i in range(depth):
        k = jax.random.fold_in(key, i)
        k1, k2, k3, k4 = jax.random.split(k, 4)
        blocks.append(dict(
            ln1=dict(g=jnp.ones((dim,), jnp.float32), b=jnp.zeros((dim,), jnp.float32)),
            qkv=init_linear(k1, dim, 3 * heads * head_dim),
            proj=init_linear(k2, heads * head_dim, dim),
            ln2=dict(g=jnp.ones((dim,), jnp.float32), b=jnp.zeros((dim,), jnp.float32)),
            fc1=init_linear(k3, dim, mlp_dim),
            fc2=init_linear(k4, mlp_dim, dim),
        ))
    return blocks


def transformer_blocks(x, blocks, heads, head_dim):
    # TODO(synk): original Transformer / temperal_Transformer source unavailable;
    # standard pre-norm MHA + GELU-MLP blocks substituted (dropout = identity, eval).
    # Residual stream kept in f32; qkv / attention / fc1 intermediates in bf16.
    B, n, C = x.shape
    M = B * n
    for blk in blocks:
        xf = x.reshape(M, C)
        # fused LN1 + QKV projection (bf16 out feeds the attention MXU directly)
        qkv = pallas_ln_linear(xf, blk['ln1']['g'], blk['ln1']['b'],
                               blk['qkv']['w'], blk['qkv']['b'],
                               out_dtype=jnp.bfloat16)
        qkv = qkv.reshape(B, n, 3, heads, head_dim).transpose(2, 0, 3, 1, 4)
        q = qkv[0].reshape(B * heads, n, head_dim)
        k = qkv[1].reshape(B * heads, n, head_dim)
        v = qkv[2].reshape(B * heads, n, head_dim)
        a = pallas_attention(q, k, v)
        a = a.reshape(B, heads, n, head_dim).transpose(0, 2, 1, 3).reshape(M, heads * head_dim)
        # fused output projection + residual add (f32 residual stream)
        x = pallas_linear(a, blk['proj']['w'], blk['proj']['b'],
                          residual=xf, out_dtype=jnp.float32).reshape(B, n, C)

        xf = x.reshape(M, C)
        # fused LN2 + FC1 + GELU (bf16 intermediate)
        h = pallas_ln_linear(xf, blk['ln2']['g'], blk['ln2']['b'],
                             blk['fc1']['w'], blk['fc1']['b'],
                             activation="gelu", out_dtype=jnp.bfloat16)
        # fused FC2 + residual add
        x = pallas_linear(h, blk['fc2']['w'], blk['fc2']['b'],
                          residual=xf, out_dtype=jnp.float32).reshape(B, n, C)
    return x


def transformer_with_pos(xyz, feats, pos_lin, blocks, heads, head_dim):
    # Positional embedding = Conv1d(4 -> C, k=1) on (x, y, z, t=0), added to features
    # (add fused into the matmul as a residual).
    # TODO(synk): exact positional handling of the original Transformer is unknown.
    B, n, C = feats.shape
    pos4 = jnp.concatenate([xyz, jnp.zeros((B, n, 1), xyz.dtype)], axis=-1)
    x = pallas_linear(pos4.reshape(B * n, 4), pos_lin['w'], pos_lin['b'],
                      residual=feats.reshape(B * n, C)).reshape(B, n, C)
    return transformer_blocks(x, blocks, heads, head_dim)


def tube_embedding(clips, params, cfg):
    # TODO(synk): P4DConv source unavailable; deterministic shape-faithful stand-in
    # producing anchor xyzs, per-anchor features, temporal neighbor points and SHOT
    # descriptors directly from the input clip.
    B, T, P, _ = clips.shape
    L, N, C = cfg['L'], cfg['N'], cfg['en_emb_dim']
    tk, ns, shotL = cfg['tk'], cfg['nsamples'], cfg['shotL']
    xyzs = clips[:, ::T // L, ::P // N, :][:, :L, :N, :]                     # (B,L,N,3)
    flat = xyzs.reshape(B * L * N, 3)
    feat = pallas_linear(flat, params['feat']['w'], params['feat']['b'])     # (B*L*N, C)
    pre = pallas_linear(flat, params['pre']['w'], params['pre']['b'])
    features = feat.reshape(B, L, N, C).transpose(0, 1, 3, 2)                # (B,L,C,N) like P4DConv
    pre_features = pre.reshape(B, L, N, C)
    xyzs_neighbors = xyzs[:, :, :, None, None, :] + params['nbr_offsets'][None, None, None]
    shot = jnp.abs(jnp.sin(pallas_linear(flat, params['shot']['w'], params['shot']['b'])))
    shot_descriptors = (shot.reshape(B, L, N, 1, shotL)
                        * params['shot_scale'].reshape(1, 1, 1, tk, 1))
    return xyzs, features, xyzs_neighbors, shot_descriptors, pre_features, xyzs_neighbors


def gather_rows(x, select, count):
    """Emulates torch `x[select].reshape(B, count, ...)` (static per-row count,
    original token order preserved)."""
    B = x.shape[0]
    order = jnp.argsort((~select).astype(jnp.int32), axis=1, stable=True)
    idx = order[:, :count]
    return x[jnp.arange(B)[:, None], idx]


def dynamic_step(key, B, L, N, features, pre_features, mask_ratio, mcm_ratio):
    distance = jnp.linalg.norm(features - pre_features, axis=3)   # (B, L, N)
    importance = distance.reshape(B, L * N)
    ids_sorted = jnp.argsort(-importance, axis=1)                 # descending
    G = L * N
    num_compressed = int((1 - mcm_ratio) * G)
    num_input = int((1 - mask_ratio) * G)
    noise = jax.random.uniform(key, (B, num_compressed))
    noise_ids = jnp.argsort(noise, axis=1)
    head = jnp.take_along_axis(ids_sorted[:, :num_compressed], noise_ids, axis=1)
    ids_sorted = ids_sorted.at[:, :num_compressed].set(head)
    ids_restore = jnp.argsort(ids_sorted, axis=1)
    input_mask = jnp.ones((B, G), jnp.float32).at[:, :num_input].set(0.0)
    target_mask = jnp.ones((B, G), jnp.float32).at[:, num_input:num_compressed].set(0.0)
    input_mask = jnp.take_along_axis(input_mask, ids_restore, axis=1).astype(bool)
    target_mask = jnp.take_along_axis(target_mask, ids_restore, axis=1).astype(bool)
    return input_mask, target_mask


def init_params(key, cfg):
    keys = jax.random.split(key, 16)
    C, Cd = cfg['en_emb_dim'], cfg['de_emb_dim']
    tk, ns, shotL = cfg['tk'], cfg['nsamples'], cfg['shotL']
    return dict(
        tube=dict(feat=init_linear(keys[0], 3, C),
                  pre=init_linear(keys[1], 3, C),
                  shot=init_linear(keys[2], 3, shotL),
                  nbr_offsets=jax.random.normal(keys[3], (tk, ns, 3), jnp.float32) * 0.05,
                  shot_scale=jnp.linspace(0.5, 1.5, tk, dtype=jnp.float32)),
        enc_pos=init_linear(keys[4], 4, C),
        enc_blocks=init_transformer(keys[5], C, cfg['en_depth'], cfg['en_heads'],
                                    cfg['en_head_dim'], cfg['en_mlp_dim']),
        enc_tmp_blocks=init_transformer(keys[6], C, cfg['en_depth'], cfg['en_heads'],
                                        cfg['en_head_dim'], cfg['en_mlp_dim']),
        enc_norm=dict(g=jnp.ones((C,), jnp.float32), b=jnp.zeros((C,), jnp.float32)),
        mask_token=jax.random.normal(keys[7], (1, 1, Cd), jnp.float32) * 0.02,
        dec_embed=init_linear(keys[8], C, Cd),
        dec_pos=init_linear(keys[9], 4, Cd),
        dec_blocks=init_transformer(keys[10], Cd, cfg['de_depth'], cfg['de_heads'],
                                    cfg['de_head_dim'], cfg['de_mlp_dim']),
        dec_tmp_blocks=init_transformer(keys[11], Cd, cfg['de_depth'], cfg['de_heads'],
                                        cfg['de_head_dim'], cfg['de_mlp_dim']),
        dec_norm=dict(g=jnp.ones((Cd,), jnp.float32), b=jnp.zeros((Cd,), jnp.float32)),
        # points + SHOT predictors concatenated into one lane-dense matmul
        pred=init_linear(keys[12], Cd, 3 * ns * tk + shotL * (tk - 1)),
    )


def forward(clips, params, cfg, mask_key):
    """Pretraining forward pass (vis=False, vcm=False): returns per-masked-token loss."""
    tk, ns, shotL = cfg['tk'], cfg['nsamples'], cfg['shotL']
    # ---------------- encoder ----------------
    xyzs, features, xyzs_neighbors, shot_descriptors, pre_features, _ = \
        tube_embedding(clips, params['tube'], cfg)
    features = features.transpose(0, 1, 3, 2)                   # (B,L,N,C)
    B, L, N, C = features.shape
    G = L * N
    all_xyzs = xyzs.reshape(B, G, 3)
    xyzs_neighbors = xyzs_neighbors.reshape(B, G, tk, ns, 3)
    shot_descriptors = shot_descriptors.reshape(B, G, tk, shotL)

    _, target_mask = dynamic_step(mask_key, B, L, N, features, pre_features,
                                  cfg['mask_ratio'], cfg['mcm_ratio'])
    bool_masked_input = target_mask        # vcm=False -> masks = (None, target_mask)
    n_vis = int((1 - cfg['mcm_ratio']) * G) - int((1 - cfg['mask_ratio']) * G)
    n_masked = G - n_vis

    features = features.reshape(B, G, C)
    fea_emb_vis = gather_rows(features, ~bool_masked_input, n_vis)
    xyzs_emb_vis = gather_rows(all_xyzs, ~bool_masked_input, n_vis)

    fea_emb_vis = transformer_with_pos(xyzs_emb_vis, fea_emb_vis, params['enc_pos'],
                                       params['enc_blocks'], cfg['en_heads'], cfg['en_head_dim'])
    tem_emb_vis = transformer_blocks(fea_emb_vis, params['enc_tmp_blocks'],
                                     cfg['en_heads'], cfg['en_head_dim'])
    enc_pre_norm = (fea_emb_vis + tem_emb_vis) * 0.5             # (B, n_vis, C)

    # ---------------- decoder ----------------
    Cd = cfg['de_emb_dim']
    # encoder_norm fused into decoder_embed (LayerNorm is row-wise, so identical result)
    emb_vis = pallas_ln_linear(enc_pre_norm.reshape(B * n_vis, C),
                               params['enc_norm']['g'], params['enc_norm']['b'],
                               params['dec_embed']['w'], params['dec_embed']['b']
                               ).reshape(B, n_vis, Cd)
    pos_vis = xyzs_emb_vis
    pos_mask = gather_rows(all_xyzs, bool_masked_input, n_masked)
    mask_tokens = jnp.broadcast_to(params['mask_token'], (B, n_masked, Cd))
    emb_all = jnp.concatenate([emb_vis, mask_tokens], axis=1)
    pos_all = jnp.concatenate([pos_vis, pos_mask], axis=1)

    emb_all = transformer_with_pos(pos_all, emb_all, params['dec_pos'],
                                   params['dec_blocks'], cfg['de_heads'], cfg['de_head_dim'])
    emb_tmp = transformer_blocks(emb_all, params['dec_tmp_blocks'],
                                 cfg['de_heads'], cfg['de_head_dim'])
    dec_pre_norm = (emb_all + emb_tmp) * 0.5
    masked_pre = dec_pre_norm[:, -n_masked:, :]                  # (B, n_masked, Cd)

    # decoder_norm fused with the concatenated points+SHOT predictor matmul
    n_pts = 3 * ns * tk
    pred = pallas_ln_linear(masked_pre.reshape(B * n_masked, Cd),
                            params['dec_norm']['g'], params['dec_norm']['b'],
                            params['pred']['w'], params['pred']['b'])
    pre_points = pred[:, :n_pts].reshape(B * n_masked, tk, ns, 3)
    pre_shot = pred[:, n_pts:].reshape(B * n_masked, tk - 1, shotL)

    # chamfer over all (token, tk) clouds in a single launch, then average over tk
    gt_points = gather_rows(xyzs_neighbors, bool_masked_input, n_masked
                            ).reshape(B * n_masked, tk, ns, 3)
    ch = pallas_chamfer(pre_points.reshape(B * n_masked * tk, ns, 3),
                        gt_points.reshape(B * n_masked * tk, ns, 3))
    point_loss = ch.reshape(B * n_masked, tk).mean(axis=1)

    # SmoothL1 on temporal SHOT differences, all tk-1 slices in one launch
    gt_shot = gather_rows(shot_descriptors, bool_masked_input, n_masked
                          ).reshape(B * n_masked, tk, shotL)
    shot_target = gt_shot[:, 1:, :] - gt_shot[:, :-1, :]
    shot_loss = pallas_smooth_l1(pre_shot.reshape(B * n_masked * (tk - 1), shotL),
                                 shot_target.reshape(B * n_masked * (tk - 1), shotL))

    return point_loss + shot_loss     # (B*n_masked,), same broadcast as the torch module


# ----------------------------------------------------------------------------
if __name__ == "__main__":
    cfg = dict(en_emb_dim=32, en_depth=1, en_heads=2, en_head_dim=8, en_mlp_dim=64,
               de_emb_dim=16, de_depth=1, de_heads=2, de_head_dim=8, de_mlp_dim=32,
               nsamples=8, tk=3,
               shotL=16,   # TODO(synk): getDescriptorLength not provided; fixed small value
               mask_ratio=0.9, mcm_ratio=0.7,
               L=2, N=8)   # temporal / spatial patch counts of the tube-embedding stand-in

    key = jax.random.PRNGKey(0)
    k_par, k_inp, k_mask = jax.random.split(key, 3)
    params = init_params(k_par, cfg)
    clips = jax.random.normal(k_inp, (2, 6, 64, 3), jnp.float32)   # (B, T, num_points, 3)

    loss = forward(clips, params, cfg, k_mask)
    loss = jax.block_until_ready(loss)

    G = cfg['L'] * cfg['N']
    n_vis = int((1 - cfg['mcm_ratio']) * G) - int((1 - cfg['mask_ratio']) * G)
    n_masked = G - n_vis
    assert loss.shape == (clips.shape[0] * n_masked,), loss.shape
    assert bool(jnp.all(jnp.isfinite(loss)))
    print("KERNEL_OK")
</pallas_src>

<mosaic_0001>
module attributes {stable_mosaic.version = 11 : i64} {
  func.func @_linear_kernel(%arg0: i32, %arg1: i32, %arg2: i32, %arg3: memref<32x128xbf16, #tpu.memory_space<vmem>>, %arg4: memref<128x128xbf16, #tpu.memory_space<vmem>>, %arg5: memref<1x128xf32, #tpu.memory_space<vmem>>, %arg6: memref<32x128xf32, #tpu.memory_space<vmem>>) attributes {dimension_semantics = [#tpu.dimension_semantics<parallel>, #tpu.dimension_semantics<parallel>, #tpu.dimension_semantics<arbitrary>], iteration_bounds = array<i64: 1, 1, 1>, scalar_prefetch = 0 : i64, scratch_operands = 0 : i64, tpu.core_type = #tpu.core_type<tc>, window_params = [{transform_indices = @transform_0, window_bounds = array<i64: 32, 128>}, {transform_indices = @transform_1, window_bounds = array<i64: 128, 128>}, {transform_indices = @transform_2, window_bounds = array<i64: 1, 128>}, {transform_indices = @transform_3, window_bounds = array<i64: 32, 128>}]} {
    %c0_i32 = arith.constant 0 : i32
    %0 = arith.cmpi eq, %arg2, %c0_i32 : i32
    %1 = arith.extui %0 : i1 to i32
    %c0_i32_0 = arith.constant 0 : i32
    %2 = arith.cmpi ne, %1, %c0_i32_0 : i32
    scf.if %2 {
      %cst_10 = arith.constant 0.000000e+00 : f32
      %12 = vector.broadcast %cst_10 : f32 to vector<32x128xf32>
      %c0_11 = arith.constant 0 : index
      %c0_12 = arith.constant 0 : index
      %13 = vector.load %arg6[%c0_11, %c0_12] : memref<32x128xf32, #tpu.memory_space<vmem>>, vector<32x128xf32>
      tpu.vector_store %arg6[%c0_11, %c0_12], %12 {strides = array<i32>} : memref<32x128xf32, #tpu.memory_space<vmem>>, vector<32x128xf32>,
    } else {
    }
    %c0 = arith.constant 0 : index
    %c0_1 = arith.constant 0 : index
    %3 = vector.load %arg6[%c0, %c0_1] : memref<32x128xf32, #tpu.memory_space<vmem>>, vector<32x128xf32>
    %c0_2 = arith.constant 0 : index
    %c0_3 = arith.constant 0 : index
    %4 = vector.load %arg3[%c0_2, %c0_3] : memref<32x128xbf16, #tpu.memory_space<vmem>>, vector<32x128xbf16>
    %c0_4 = arith.constant 0 : index
    %c0_5 = arith.constant 0 : index
    %5 = vector.load %arg4[%c0_4, %c0_5] : memref<128x128xbf16, #tpu.memory_space<vmem>>, vector<128x128xbf16>
    %cst = arith.constant dense<0.000000e+00> : vector<32x128xf32>
    %6 = tpu.matmul %4, %5, %cst {dimension_numbers = #tpu.dot_dimension_numbers<[1], [0], [0], [1], [0, 0, 1, 1], [], []>} : vector<32x128xbf16>, vector<128x128xbf16>, vector<32x128xf32> -> vector<32x128xf32>
    %7 = arith.addf %3, %6 : vector<32x128xf32>
    %c0_6 = arith.constant 0 : index
    %c0_7 = arith.constant 0 : index
    %8 = vector.load %arg6[%c0_6, %c0_7] : memref<32x128xf32, #tpu.memory_space<vmem>>, vector<32x128xf32>
    tpu.vector_store %arg6[%c0_6, %c0_7], %7 {strides = array<i32>} : memref<32x128xf32, #tpu.memory_space<vmem>>, vector<32x128xf32>,
    %c0_i32_8 = arith.constant 0 : i32
    %9 = arith.cmpi eq, %arg2, %c0_i32_8 : i32
    %10 = arith.extui %9 : i1 to i32
    %c0_i32_9 = arith.constant 0 : i32
    %11 = arith.cmpi ne, %10, %c0_i32_9 : i32
    scf.if %11 {
      %c0_10 = arith.constant 0 : index
      %c0_11 = arith.constant 0 : index
      %12 = vector.load %arg6[%c0_10, %c0_11] : memref<32x128xf32, #tpu.memory_space<vmem>>, vector<32x128xf32>
      %c0_12 = arith.constant 0 : index
      %c0_13 = arith.constant 0 : index
      %13 = vector.load %arg5[%c0_12, %c0_13] : memref<1x128xf32, #tpu.memory_space<vmem>>, vector<1x128xf32>
      %14 = vector.broadcast %13 : vector<1x128xf32> to vector<32x128xf32>
      %15 = arith.addf %12, %14 : vector<32x128xf32>
      %c0_14 = arith.constant 0 : index
      %c0_15 = arith.constant 0 : index
      %16 = vector.load %arg6[%c0_14, %c0_15] : memref<32x128xf32, #tpu.memory_space<vmem>>, vector<32x128xf32>
      tpu.vector_store %arg6[%c0_14, %c0_15], %15 {strides = array<i32>} : memref<32x128xf32, #tpu.memory_space<vmem>>, vector<32x128xf32>,
    } else {
    }
    return
  }
  func.func @transform_0(%arg0: i32, %arg1: i32, %arg2: i32) -> (i32, i32) {
    %c0_i32 = arith.constant 0 : i32
    return %arg0, %arg2 : i32, i32
  }
  func.func @transform_1(%arg0: i32, %arg1: i32, %arg2: i32) -> (i32, i32) {
    %c0_i32 = arith.constant 0 : i32
    return %arg2, %arg1 : i32, i32
  }
  func.func @transform_2(%arg0: i32, %arg1: i32, %arg2: i32) -> (i32, i32) {
    %c0_i32 = arith.constant 0 : i32
    %c0_i32_0 = arith.constant 0 : i32
    return %c0_i32, %arg1 : i32, i32
  }
  func.func @transform_3(%arg0: i32, %arg1: i32, %arg2: i32) -> (i32, i32) {
    %c0_i32 = arith.constant 0 : i32
    return %arg0, %arg1 : i32, i32
  }
}

</mosaic_0001>

<llo_original>
// kernel: tpu_custom_call.1
$region0: #{tpu_custom_call.1}
  #allocation0 [shape = 'u32[]', space=smem, size = 0x4, offset = 0x4, fixed_abs, tag = 'smem constant byte address 0x4 - core index']
  #allocation1 [shape = 'u32[144,128]{1,0:T(1,128)}', space=vmem, size = 0x12000, scoped, tag = 'internal scratch']
  %s0 = inlined_call_operand.hbm [shape: bf16[32,128], index: 0, kind: input, shape index: {}]
  %s1 = inlined_call_operand.hbm [shape: bf16[128,128], index: 1, kind: input, shape index: {}]
  %s2 = inlined_call_operand.vmem [shape: f32[1,128], index: 2, kind: input, shape index: {}]
  %s3 = inlined_call_operand.hbm [shape: f32[32,128], index: 3, kind: output, shape index: {}]
  %s4 = sld [smem:[#allocation0]]
  $region38: #{tpu_custom_call.1} parent=0
    _
  %s6 = ssub.s32 1, %s4
  %s7 = scalar_select 0, %s6, %s4
  $region1: #{tpu_custom_call.1} parent=0
    #allocation2 [shape = 'u8[8192]{0}', space=vmem, size = 0x2000, scoped, tag = 'input window, operand 0, single buffered']
    #allocation3 [shape = 's32[1]{0}', space=sflag, size = 0x4, scoped, tag = 'scoped memory for tpu_custom_call.1']
    #allocation4 [shape = 's32[1]{0}', space=sflag, size = 0x4, scoped, tag = 'scoped memory for tpu_custom_call.1']
    #allocation5 [shape = 'u8[32768]{0}', space=vmem, size = 0x8000, scoped, tag = 'input window, operand 1, single buffered']
    #allocation6 [shape = 's32[1]{0}', space=sflag, size = 0x4, scoped, tag = 'scoped memory for tpu_custom_call.1']
    #allocation7 [shape = 'u8[16384]{0}', space=vmem, size = 0x4000, scoped, tag = 'output window, operand 0, single buffered']
    %8 = vsyncpa [#allocation3], 0
    %9 = vsyncpa [#allocation6], 0
    %10 = vsyncpa [#allocation4], 0
    // Predicated region
    $region2: #{tpu_custom_call.1} parent=1 // pred_check
      _
    $region3: #{tpu_custom_call.1} parent=1 // pred_check_branch
      %12 = sbr.rel (0) target = $region5
    $region4: #{tpu_custom_call.1} parent=1 // pred_region
      %s14 = ssub.s32 256, 256
      %15 = vsyncadd [#allocation3], %s14
      %s16 = sshll.u32 [#allocation2], 4
      %s17 = int_to_ptr.vmem [resolvable:$true] %s16
      %22 = dma.hbm_to_vmem [thread:$0]  %s0, 256, %s17, [#allocation3], 64, 64, 4
    $region5: #{tpu_custom_call.1} parent=1 // pred_fallthru
      _
    // Predicated region
    $region6: #{tpu_custom_call.1} parent=1 // pred_check
      _
    $region7: #{tpu_custom_call.1} parent=1 // pred_check_branch
      %24 = sbr.rel (0) target = $region9
    $region8: #{tpu_custom_call.1} parent=1 // pred_region
      %s26 = ssub.s32 1024, 1024
      %27 = vsyncadd [#allocation6], %s26
      %s28 = sshll.u32 [#allocation5], 4
      %s29 = int_to_ptr.vmem [resolvable:$true] %s28
      %34 = dma.hbm_to_vmem [thread:$0]  %s1, 1024, %s29, [#allocation6], 64, 64, 4
    $region9: #{tpu_custom_call.1} parent=1 // pred_fallthru
      _
    // Predicated region
    $region10: #{tpu_custom_call.1} parent=1 // pred_check
      _
    $region11: #{tpu_custom_call.1} parent=1 // pred_check_branch
      %36 = sbr.rel (0) target = $region13
    $region12: #{tpu_custom_call.1} parent=1 // pred_region
      _
    $region13: #{tpu_custom_call.1} parent=1 // pred_fallthru
      _
    // Predicated region
    $region14: #{tpu_custom_call.1} parent=1 // pred_check
      _
    $region15: #{tpu_custom_call.1} parent=1 // pred_check_branch
      %38 = sbr.rel (0) target = $region17
    $region16: #{tpu_custom_call.1} parent=1 // pred_region
      %39 = dma.done [#allocation3], 256
    $region17: #{tpu_custom_call.1} parent=1 // pred_fallthru
      _
    // Predicated region
    $region18: #{tpu_custom_call.1} parent=1 // pred_check
      _
    $region19: #{tpu_custom_call.1} parent=1 // pred_check_branch
      %41 = sbr.rel (0) target = $region21
    $region20: #{tpu_custom_call.1} parent=1 // pred_region
      %42 = dma.done [#allocation6], 1024
    $region21: #{tpu_custom_call.1} parent=1 // pred_fallthru
      _
    %p44 = scmp.eq.s32.totalorder 0, 0
    // Predicated region
    $region22: #{tpu_custom_call.1} parent=1 // pred_check
      %p45 = pneg %p44
    $region23: #{tpu_custom_call.1} parent=1 // pred_check_branch
      %47 = sbr.rel (%p45) target = $region25
    $region24: #{tpu_custom_call.1} parent=1 // pred_region
      %48 = vst [vmem:[#allocation7] sm:$0xff] 0.0
      %49 = vst [vmem:[#allocation7 + $0x8] sm:$0xff] 0.0
      %50 = vst [vmem:[#allocation7 + $0x10] sm:$0xff] 0.0
      %51 = vst [vmem:[#allocation7 + $0x18] sm:$0xff] 0.0
    $region25: #{tpu_custom_call.1} parent=1 // pred_fallthru
      _
    %v52 = vld [vmem:[#allocation7] sm:$0xff]
    %v53 = vld [vmem:[#allocation7 + $0x8] sm:$0xff]
    %v54 = vld [vmem:[#allocation7 + $0x10] sm:$0xff]
    %v55 = vld [vmem:[#allocation7 + $0x18] sm:$0xff]
    %v56 = vld [vmem:[#allocation2] sm:$0xf]
    %v57 = vld [vmem:[#allocation2 + $0x4] sm:$0xf]
    %v58 = vld [vmem:[#allocation2 + $0x8] sm:$0xf]
    %v59 = vld [vmem:[#allocation2 + $0xc] sm:$0xf]
    %v60 = vld [vmem:[#allocation5] sm:$0xf]
    %v61 = vld [vmem:[#allocation5 + $0x4] sm:$0xf]
    %v62 = vld [vmem:[#allocation5 + $0x8] sm:$0xf]
    %v63 = vld [vmem:[#allocation5 + $0xc] sm:$0xf]
    %v64 = vld [vmem:[#allocation5 + $0x10] sm:$0xf]
    %v65 = vld [vmem:[#allocation5 + $0x14] sm:$0xf]
    %v66 = vld [vmem:[#allocation5 + $0x18] sm:$0xf]
    %v67 = vld [vmem:[#allocation5 + $0x1c] sm:$0xf]
    %v68 = vld [vmem:[#allocation5 + $0x20] sm:$0xf]
    %v69 = vld [vmem:[#allocation5 + $0x24] sm:$0xf]
    %v70 = vld [vmem:[#allocation5 + $0x28] sm:$0xf]
    %v71 = vld [vmem:[#allocation5 + $0x2c] sm:$0xf]
    %v72 = vld [vmem:[#allocation5 + $0x30] sm:$0xf]
    %v73 = vld [vmem:[#allocation5 + $0x34] sm:$0xf]
    %v74 = vld [vmem:[#allocation5 + $0x38] sm:$0xf]
    %v75 = vld [vmem:[#allocation5 + $0x3c] sm:$0xf]
    %v80 = vunpack.c.l.b16 %v56
    %v81 = vunpack.c.l.b16 %v57
    %v82 = vunpack.c.l.b16 %v58
    %v83 = vunpack.c.l.b16 %v59
    %v84 = vpack.c.b16 %v81, %v80
    %v85 = vpack.c.b16 %v83, %v82
    %v104 = vunpack.c.l.b16 %v60
    %v105 = vunpack.c.l.b16 %v61
    %v106 = vunpack.c.l.b16 %v62
    %v107 = vunpack.c.l.b16 %v63
    %v108 = vunpack.c.l.b16 %v64
    %v109 = vunpack.c.l.b16 %v65
    %v110 = vunpack.c.l.b16 %v66
    %v111 = vunpack.c.l.b16 %v67
    %v112 = vunpack.c.l.b16 %v68
    %v113 = vunpack.c.l.b16 %v69
    %v114 = vunpack.c.l.b16 %v70
    %v115 = vunpack.c.l.b16 %v71
    %v116 = vunpack.c.l.b16 %v72
    %v117 = vunpack.c.l.b16 %v73
    %v118 = vunpack.c.l.b16 %v74
    %v119 = vunpack.c.l.b16 %v75
    %v120 = vpack.c.b16 %v105, %v104
    %v121 = vpack.c.b16 %v107, %v106
    %v122 = vpack.c.b16 %v109, %v108
    %v123 = vpack.c.b16 %v111, %v110
    %v124 = vpack.c.b16 %v113, %v112
    %v125 = vpack.c.b16 %v115, %v114
    %v126 = vpack.c.b16 %v117, %v116
    %v127 = vpack.c.b16 %v119, %v118
    %136 = vmatprep.subr.bf16.mxu0 0
    %137 = vmatpush1.bf16.msra.mxu0 %v127
    %138 = vmatprep.subr.bf16.mxu0 0
    %139 = vmatpush1.bf16.msra.mxu0 %v126
    %140 = vmatprep.subr.bf16.mxu0 0
    %141 = vmatpush1.bf16.msra.mxu0 %v125
    %142 = vmatprep.subr.bf16.mxu0 0
    %143 = vmatpush1.bf16.msra.mxu0 %v124
    %144 = vmatprep.subr.bf16.mxu0 0
    %145 = vmatpush1.bf16.msra.mxu0 %v123
    %146 = vmatprep.subr.bf16.mxu0 0
    %147 = vmatpush1.bf16.msra.mxu0 %v122
    %148 = vmatprep.subr.bf16.mxu0 0
    %149 = vmatpush1.bf16.msra.mxu0 %v121
    %150 = vmatprep.subr.bf16.mxu0 0
    %151 = vmatpush1.bf16.msra.mxu0 %v120
    %152 = vmatprep.subr.bf16.mxu0 0
    %153 = vmatpush2.bf16.msra.mxu0 0
    %154 = vmatprep.subr.bf16.mxu0 0
    %155 = vmatpush2.bf16.msra.mxu0 0
    %156 = vmatprep.subr.bf16.mxu0 0
    %157 = vmatpush2.bf16.msra.mxu0 0
    %158 = vmatprep.subr.bf16.mxu0 0
    %159 = vmatpush2.bf16.msra.mxu0 0
    %160 = vmatprep.subr.bf16.mxu0 0
    %161 = vmatpush2.bf16.msra.mxu0 0
    %162 = vmatprep.subr.bf16.mxu0 0
    %163 = vmatpush2.bf16.msra.mxu0 0
    %164 = vmatprep.subr.bf16.mxu0 0
    %165 = vmatpush2.bf16.msra.mxu0 0
    %166 = vmatprep.subr.bf16.mxu0 0
    %167 = vmatpush2.bf16.msra.mxu0 0
    %168 = vmatprep.mubr.bf16.mxu0 0
    %169 = vmatmul.mubr.bf16.gmra.mxu0 %v84
    %v170 = vpop.f32.mrf.mxu0
    %v171 = vadd.f32 0.0, %v170
    %v172 = vpop.f32.mrf.mxu0
    %v173 = vpop.f32.mrf.mxu0
    %v174 = vadd.f32 0.0, %v173
    %v175 = vpop.f32.mrf.mxu0
    %176 = vmatprep.mubr.bf16.mxu0 0
    %177 = vmatmul.mubr.bf16.gmra.mxu0 %v85
    %v178 = vpop.f32.mrf.mxu0
    %v179 = vadd.f32 0.0, %v178
    %v180 = vpop.f32.mrf.mxu0
    %v181 = vpop.f32.mrf.mxu0
    %v182 = vadd.f32 0.0, %v181
    %v183 = vpop.f32.mrf.mxu0
    %184 = vdwg.mxu0
    %v185 = vadd.f32 %v52, %v171
    %v186 = vadd.f32 %v53, %v174
    %v187 = vadd.f32 %v54, %v179
    %v188 = vadd.f32 %v55, %v182
    %189 = vst [vmem:[#allocation7] sm:$0xff] %v185
    %190 = vst [vmem:[#allocation7 + $0x8] sm:$0xff] %v186
    %191 = vst [vmem:[#allocation7 + $0x10] sm:$0xff] %v187
    %192 = vst [vmem:[#allocation7 + $0x18] sm:$0xff] %v188
    // Predicated region
    $region26: #{tpu_custom_call.1} parent=1 // pred_check
      %p193 = pneg %p44
    $region27: #{tpu_custom_call.1} parent=1 // pred_check_branch
      %195 = sbr.rel (%p193) target = $region29
    $region28: #{tpu_custom_call.1} parent=1 // pred_region
      %v196 = vld [vmem:[#allocation7] sm:$0xff]
      %v197 = vld [vmem:[#allocation7 + $0x8] sm:$0xff]
      %v198 = vld [vmem:[#allocation7 + $0x10] sm:$0xff]
      %v199 = vld [vmem:[#allocation7 + $0x18] sm:$0xff]
      %v200 = vld [vmem:[%s2] sm:$0x1]
      %v202 = vlaneseq
      %v203 = vshrl.u32 %v202, 7
      %v204 = vsub.s32 0, %v203
      %v205 = vrot.slane %v200, %v204
      %v207 = vadd.f32 %v196, %v205
      %v208 = vadd.f32 %v197, %v205
      %v209 = vadd.f32 %v198, %v205
      %v210 = vadd.f32 %v199, %v205
      %211 = vst [vmem:[#allocation7] sm:$0xff] %v207
      %212 = vst [vmem:[#allocation7 + $0x8] sm:$0xff] %v208
      %213 = vst [vmem:[#allocation7 + $0x10] sm:$0xff] %v209
      %214 = vst [vmem:[#allocation7 + $0x18] sm:$0xff] %v210
    $region29: #{tpu_custom_call.1} parent=1 // pred_fallthru
      _
    // Predicated region
    $region30: #{tpu_custom_call.1} parent=1 // pred_check
      _
    $region31: #{tpu_custom_call.1} parent=1 // pred_check_branch
      %216 = sbr.rel (0) target = $region33
    $region32: #{tpu_custom_call.1} parent=1 // pred_region
      %s218 = ssub.s32 512, 512
      %219 = vsyncadd [#allocation4], %s218
      %s220 = sshll.u32 [#allocation7], 4
      %s221 = int_to_ptr.vmem [resolvable:$true] %s220
      %226 = dma.vmem_to_hbm [thread:$0]  %s221, 512, %s3, [#allocation4], 128, 128, 8
    $region33: #{tpu_custom_call.1} parent=1 // pred_fallthru
      _
    // Predicated region
    $region34: #{tpu_custom_call.1} parent=1 // pred_check
      _
    $region35: #{tpu_custom_call.1} parent=1 // pred_check_branch
      %228 = sbr.rel (0) target = $region37
    $region36: #{tpu_custom_call.1} parent=1 // pred_region
      %229 = dma.done [#allocation4], 512
    $region37: #{tpu_custom_call.1} parent=1 // pred_fallthru
      _
    %230 = vsyncpa [#allocation3], 1
    %231 = vsyncpa [#allocation6], 1
    %232 = vsyncpa [#allocation4], 1

</llo_original>
